<compile_context>
chip_gen: v7x
topology: tpu7x:2x2x1
jax: 0.10.0
libtpu: 0.0.40
codegen_flags: <defaults>
</compile_context>

<pallas_src>
import functools

import jax
import jax.numpy as jnp
from jax.experimental import pallas as pl
from jax.experimental.pallas import tpu as pltpu


def _color_shift_kernel(shift_ref, img_ref, out_ref, *, tr):
    # shift_ref: (R_pad, 1) resident f32 per-row additive shift,
    #            row = flattened (batch, channel) index.
    # img_ref / out_ref: (tr, tl) lane-dense tile of the flattened image.
    if shift_ref.shape[0] == tr:
        s = shift_ref[...]                       # single row block: whole vector
    else:
        i = pl.program_id(1)                     # row-block index (inner axis)
        row0 = pl.multiple_of(i * tr, tr)        # tr-aligned (tr % sub_mult == 0)
        s = shift_ref[pl.ds(row0, tr), :]
    x = img_ref[...].astype(jnp.float32)
    out_ref[...] = jnp.clip(x + s, 0.0, 1.0).astype(out_ref.dtype)


def _sublane_multiple(itemsize):
    # Native packed tiling: (8,128) f32, (16,128) bf16/f16, (32,128) int8/fp8.
    return {4: 8, 2: 16, 1: 32}.get(itemsize, 8)


def _vmem_params():
    """(target bytes per buffer, scoped vmem limit) sized to this chip's VMEM."""
    cap = 128 << 20                              # v5e / v6e default
    try:
        info = pltpu.get_tpu_info()
        cap = int(getattr(info, "vmem_capacity_bytes", cap))
    except Exception:
        pass                                     # query unavailable -> fall back
    target = int(min(8 << 20, max(2 << 20, cap // 16)))  # 8 MiB @128M, 4 MiB @64M
    limit = int(min(cap // 2, 48 << 20))
    limit = max(limit, 4 * target + (1 << 20))   # double-buffered in + out
    return target, limit


def _choose_block(num_rows, num_lanes, itemsize, target_bytes, sub_mult):
    """Pick (tr, tl) obeying the (sub_mult, 128)-or-full-dim rule, ~target_bytes/buffer."""
    # Lane (last-dim) tile: full extent if a sub_mult-row slab fits the budget,
    # else the largest multiple of 128 that does (lane-dense unmasked stores).
    if num_lanes <= 128 or sub_mult * num_lanes * itemsize <= target_bytes:
        tl = num_lanes
    else:
        tl = max(128, (target_bytes // (sub_mult * itemsize)) // 128 * 128)
    # Row (sublane) tile: full extent if it fits with the chosen lane tile,
    # else the largest multiple of sub_mult that does.
    max_rows = max(sub_mult, target_bytes // (tl * itemsize))
    if num_rows <= max_rows:
        tr = num_rows                            # full dim -> always legal
    else:
        tr = max(sub_mult, (max_rows // sub_mult) * sub_mult)
    return tr, tl


def random_color_temp_tint(image, key, temp_strength=0.1, tint_strength=0.1):
    """image: (B, 3, H, W) float array in [0, 1]."""
    B, C, H, W = image.shape
    assert C == 3, "RandomColorTempTint expects 3 channels (RGB)"

    k_temp, k_tint = jax.random.split(key)
    temp_shift = jax.random.uniform(
        k_temp, (), minval=-temp_strength, maxval=temp_strength)
    tint_shift = jax.random.uniform(
        k_tint, (), minval=-tint_strength, maxval=tint_strength)
    # Per-channel additive shifts: R gets +temp, G gets +tint, B gets -temp,
    # expanded to one f32 shift per flattened (batch, channel) row.
    chan_shifts = jnp.stack([temp_shift, tint_shift, -temp_shift]).astype(jnp.float32)
    row_shifts = jnp.tile(chan_shifts, B).reshape(B * C, 1)

    R = B * C
    L = H * W
    img2 = image.reshape(R, L)                   # contiguous NCHW -> free reshape
    itemsize = jnp.dtype(image.dtype).itemsize
    sub_mult = _sublane_multiple(itemsize)

    target_bytes, vmem_limit = _vmem_params()
    tr, tl = _choose_block(R, L, itemsize, target_bytes, sub_mult)

    # Lane axis first (many blocks) so the megacore parallel split lands on it;
    # the row axis (often a single block) is innermost.
    grid = (pl.cdiv(L, tl), pl.cdiv(R, tr))

    # Resident shift block: pad rows to a multiple of tr so in-kernel slicing
    # never goes out of bounds (padded rows are never written back).
    r_pad = pl.cdiv(R, tr) * tr
    if r_pad != R:
        row_shifts = jnp.pad(row_shifts, ((0, r_pad - R), (0, 0)))

    n_elems = R * L
    cost = pl.CostEstimate(
        flops=3 * n_elems,                       # add + clamp (2 compares)
        transcendentals=0,
        bytes_accessed=2 * n_elems * itemsize,   # read + write
    )

    out2 = pl.pallas_call(
        functools.partial(_color_shift_kernel, tr=tr),
        out_shape=jax.ShapeDtypeStruct((R, L), image.dtype),
        grid=grid,
        in_specs=[
            pl.BlockSpec((r_pad, 1), lambda j, i: (0, 0)),   # resident shifts
            pl.BlockSpec((tr, tl), lambda j, i: (i, j)),     # image tile
        ],
        out_specs=pl.BlockSpec((tr, tl), lambda j, i: (i, j)),
        compiler_params=pltpu.CompilerParams(
            dimension_semantics=("parallel", "parallel"),
            vmem_limit_bytes=vmem_limit,
        ),
        cost_estimate=cost,
        input_output_aliases={1: 0},             # image buffer -> output buffer
    )(row_shifts, img2)

    return out2.reshape(B, C, H, W)


# Jitted entry point with the image buffer donated so the pallas_call alias is
# honored by XLA (no defensive copy of the input on this HBM-bound kernel).
random_color_temp_tint_jit = jax.jit(
    random_color_temp_tint,
    static_argnames=("temp_strength", "tint_strength"),
    donate_argnums=(0,),
)


if __name__ == "__main__":
    key = jax.random.PRNGKey(0)
    k_img, k_shift = jax.random.split(key)

    B, C, H, W = 2, 3, 16, 16
    image = jax.random.uniform(k_img, (B, C, H, W), dtype=jnp.float32)

    # Reference (plain JAX, same RNG derivation) computed *before* the kernel
    # call, since `image` is donated to the jitted kernel wrapper below.
    kt, ki = jax.random.split(k_shift)
    temp = jax.random.uniform(kt, (), minval=-0.1, maxval=0.1)
    tint = jax.random.uniform(ki, (), minval=-0.1, maxval=0.1)
    shifts_ref = jnp.stack([temp, tint, -temp]).reshape(1, 3, 1, 1)
    expected = jax.block_until_ready(jnp.clip(image + shifts_ref, 0.0, 1.0))

    out = random_color_temp_tint_jit(image, k_shift)
    out = jax.block_until_ready(out)

    assert out.shape == expected.shape
    assert out.dtype == expected.dtype
    assert jnp.allclose(out, expected, atol=1e-6), "mismatch vs reference"

    print("KERNEL_OK")
</pallas_src>

<mosaic_0001>
module attributes {stable_mosaic.version = 11 : i64} {
  func.func @_color_shift_kernel(%arg0: i32, %arg1: i32, %arg2: memref<6x1xf32, #tpu.memory_space<vmem>>, %arg3: memref<6x256xf32, #tpu.memory_space<vmem>>, %arg4: memref<6x256xf32, #tpu.memory_space<vmem>>) attributes {dimension_semantics = [#tpu.dimension_semantics<parallel>, #tpu.dimension_semantics<parallel>], iteration_bounds = array<i64: 1, 1>, scalar_prefetch = 0 : i64, scratch_operands = 0 : i64, tpu.core_type = #tpu.core_type<tc>, window_params = [{pipeline_mode = #tpu.pipeline_mode<synchronous>, transform_indices = @transform_0, window_bounds = array<i64: 6, 1>}, {transform_indices = @transform_1, window_bounds = array<i64: 6, 256>}, {transform_indices = @transform_2, window_bounds = array<i64: 6, 256>}]} {
    %c0 = arith.constant 0 : index
    %c0_0 = arith.constant 0 : index
    %0 = vector.load %arg2[%c0, %c0_0] : memref<6x1xf32, #tpu.memory_space<vmem>>, vector<6x1xf32>
    %c0_1 = arith.constant 0 : index
    %c0_2 = arith.constant 0 : index
    %1 = vector.load %arg3[%c0_1, %c0_2] : memref<6x256xf32, #tpu.memory_space<vmem>>, vector<6x256xf32>
    %2 = vector.broadcast %0 : vector<6x1xf32> to vector<6x256xf32>
    %3 = arith.addf %1, %2 : vector<6x256xf32>
    %cst = arith.constant 0.000000e+00 : f32
    %cst_3 = arith.constant 1.000000e+00 : f32
    %4 = vector.broadcast %cst : f32 to vector<6x256xf32>
    %5 = arith.maximumf %4, %3 : vector<6x256xf32>
    %6 = vector.broadcast %cst_3 : f32 to vector<6x256xf32>
    %7 = arith.minimumf %6, %5 : vector<6x256xf32>
    %c0_4 = arith.constant 0 : index
    %c0_5 = arith.constant 0 : index
    %8 = vector.load %arg4[%c0_4, %c0_5] : memref<6x256xf32, #tpu.memory_space<vmem>>, vector<6x256xf32>
    tpu.vector_store %arg4[%c0_4, %c0_5], %7 {strides = array<i32>} : memref<6x256xf32, #tpu.memory_space<vmem>>, vector<6x256xf32>,
    return
  }
  func.func @transform_0(%arg0: i32, %arg1: i32) -> (i32, i32) {
    %c0_i32 = arith.constant 0 : i32
    %c0_i32_0 = arith.constant 0 : i32
    %c0_i32_1 = arith.constant 0 : i32
    return %c0_i32, %c0_i32_0 : i32, i32
  }
  func.func @transform_1(%arg0: i32, %arg1: i32) -> (i32, i32) {
    %c0_i32 = arith.constant 0 : i32
    return %arg1, %arg0 : i32, i32
  }
  func.func @transform_2(%arg0: i32, %arg1: i32) -> (i32, i32) {
    %c0_i32 = arith.constant 0 : i32
    return %arg1, %arg0 : i32, i32
  }
}

</mosaic_0001>

<llo_original>
// kernel: tile.8
$region0: #{tile.8}
  #allocation0 [shape = 's32[1]{0}', space=sflag, size = 0x4, scoped, tag = 'scoped memory for tile.8']
  %s0 = inlined_call_operand.vmem [shape: f32[3], index: 0, kind: input, shape index: {}]
  %s1 = inlined_call_operand.vmem [shape: f32[2,3], index: 1, kind: output, shape index: {}]
  // Predicated region
  $region2: #{tile.8} parent=0 // pred_check
    _
  $region3: #{tile.8} parent=0 // pred_check_branch
    %3 = sbr.rel (0) target = $region5
  $region4: #{tile.8} parent=0 // pred_region
    _
  $region5: #{tile.8} parent=0 // pred_fallthru
    _
  %v4 = vld [vmem:[%s0] ss:$0 sm:$0xff]
  %5 = vst [vmem:[%s1] sm:$0x3] %v4

// kernel: tile.0
$region0: #{tile.0}
  %s0 = inlined_call_operand.vmem [shape: f32[2,3], index: 0, kind: input, shape index: {}]
  %s1 = inlined_call_operand.vmem [shape: f32[6,1], index: 1, kind: output, shape index: {}]
  $region1: #{tile.0} parent=0
    #allocation0 [shape = 'u8[4096]{0}', space=vmem, size = 0x1000, scoped, tag = 'scoped mem for input reshape']
    %s3 = sshllo.u32 0, 2
    %v4 = vld [vmem:[%s0] sm:%s3]
    %5 = vst [vmem:[#allocation0] sm:%s3] %v4
    %v6 = vld [vmem:[#allocation0] sm:$0x3]
    %vm7 = vcmask 7168
    %8 = vst.msk [vmem:[%s1] ss:$3 sm:$0x3] %vm7, %v6
    %v9 = vld [vmem:[#allocation0] sm:$0x3]
    %10 = vrot.lane.b32.xlu0 %v9, 127
    %v11 = vpop.permute.xlu0 %10
    %vm12 = vcmask 7168
    %s13 = scalar_lea.vmem %s1, 1
    %14 = vst.msk [vmem:[%s13] ss:$3 sm:$0x3] %vm12, %v11
    %v15 = vld [vmem:[#allocation0] sm:$0x3]
    %16 = vrot.lane.b32.xlu0 %v15, 126
    %v17 = vpop.permute.xlu0 %16
    %vm18 = vcmask 7168
    %s19 = scalar_lea.vmem %s1, 2
    %20 = vst.msk [vmem:[%s19] ss:$3 sm:$0x3] %vm18, %v17

// kernel: random_color_temp_tint.3
$region0: #{random_color_temp_tint.3}
  #allocation0 [shape = 'u32[]', space=smem, size = 0x4, offset = 0x4, fixed_abs, tag = 'smem constant byte address 0x4 - core index']
  #allocation1 [shape = 'u32[144,128]{1,0:T(1,128)}', space=vmem, size = 0x12000, scoped, tag = 'internal scratch']
  %s0 = inlined_call_operand.vmem [shape: f32[6,1], index: 0, kind: input, shape index: {}]
  %s1 = inlined_call_operand.vmem [shape: f32[6,256], index: 1, kind: input, shape index: {}, may-alias: {1,2}]
  %s2 = inlined_call_operand.vmem [shape: f32[6,256], index: 2, kind: output, shape index: {}, may-alias: {1,2}]
  %s3 = sld [smem:[#allocation0]]
  $region18: #{random_color_temp_tint.3} parent=0
    _
  %s5 = ssub.s32 1, %s3
  %s6 = scalar_select 0, %s5, %s3
  // Predicated region
  $region2: #{random_color_temp_tint.3} parent=0 // pred_check
    _
  $region3: #{random_color_temp_tint.3} parent=0 // pred_check_branch
    %8 = sbr.rel (0) target = $region5
  $region4: #{random_color_temp_tint.3} parent=0 // pred_region
    _
  $region5: #{random_color_temp_tint.3} parent=0 // pred_fallthru
    _
  // Predicated region
  $region6: #{random_color_temp_tint.3} parent=0 // pred_check
    _
  $region7: #{random_color_temp_tint.3} parent=0 // pred_check_branch
    %10 = sbr.rel (0) target = $region9
  $region8: #{random_color_temp_tint.3} parent=0 // pred_region
    _
  $region9: #{random_color_temp_tint.3} parent=0 // pred_fallthru
    _
  %v11 = vld [vmem:[%s0] sm:$0x3f]
  %v12 = vld [vmem:[%s1] sm:$0x3f]
  %v13 = vld [vmem:[%s1 + $0x8] sm:$0x3f]
  %15 = vset.pattern.permute.xlu0 0
  %16 = vperm.xlu0 %15, %v11
  %v17 = vpop.permute.xlu0 %16
  %v19 = vadd.f32 %v12, %v17
  %v20 = vadd.f32 %v13, %v17
  %v21 = vmax.f32 %v19, 0.0
  %v22 = vmax.f32 %v20, 0.0
  %v23 = vmin.f32 %v21, 1.0
  %v24 = vmin.f32 %v22, 1.0
  %25 = vst [vmem:[%s2] sm:$0x3f] %v23
  %26 = vst [vmem:[%s2 + $0x8] sm:$0x3f] %v24
  // Predicated region
  $region10: #{random_color_temp_tint.3} parent=0 // pred_check
    _
  $region11: #{random_color_temp_tint.3} parent=0 // pred_check_branch
    %28 = sbr.rel (0) target = $region13
  $region12: #{random_color_temp_tint.3} parent=0 // pred_region
    _
  $region13: #{random_color_temp_tint.3} parent=0 // pred_fallthru
    _
  // Predicated region
  $region14: #{random_color_temp_tint.3} parent=0 // pred_check
    _
  $region15: #{random_color_temp_tint.3} parent=0 // pred_check_branch
    %30 = sbr.rel (0) target = $region17
  $region16: #{random_color_temp_tint.3} parent=0 // pred_region
    _
  $region17: #{random_color_temp_tint.3} parent=0 // pred_fallthru
    _

</llo_original>
